<compile_context>
chip_gen: v7x
topology: tpu7x:2x2x1
jax: 0.10.0
libtpu: 0.0.40
codegen_flags: <defaults>
</compile_context>

<pallas_src>
import functools

import jax
import jax.numpy as jnp
from jax.experimental import pallas as pl
from jax.experimental.pallas import tpu as pltpu

_LANES = 128
_SUBLANES = 8
_MAX_BLOCK_ROWS = 4096  # 4096x128 f32 = 2 MiB/input block; safe on v5e/v6e/v7x


def _round_up(x, m):
    return ((x + m - 1) // m) * m


def _focal_tversky_kernel(n_ref, x_ref, t_ref, out_ref):
    """Accumulate per-core [sum(p*t), sum(p), sum(t)] into a (1,3,8,128) block."""
    c = pl.program_id(0)            # core-split axis ("parallel")
    i = pl.program_id(1)            # sequential reduction axis ("arbitrary")
    num_inner = pl.num_programs(1)
    block_rows = x_ref.shape[0]
    block_elems = block_rows * _LANES

    @pl.when(i == 0)
    def _init():
        out_ref[...] = jnp.zeros(out_ref.shape, jnp.float32)

    x = x_ref[...].astype(jnp.float32)
    t = t_ref[...].astype(jnp.float32)
    # sigmoid via tanh: single EUP push per vreg (vs exp + reciprocal).
    p = 0.5 * jnp.tanh(0.5 * x) + 0.5

    def _reduce(v):
        # (block_rows, 128) -> (8, 128): pure vreg-wise VPU adds, no cross-lane.
        return v.reshape(-1, _SUBLANES, _LANES).sum(axis=0)

    def _accum(p_blk, t_blk):
        out_ref[0, 0] += _reduce(p_blk * t_blk)
        out_ref[0, 1] += _reduce(p_blk)
        out_ref[0, 2] += _reduce(t_blk)

    # Flattened element offset of this *logical* block.
    base = (c * num_inner + i) * block_elems
    needs_mask = base + block_elems > n_ref[0]

    @pl.when(needs_mask)
    def _tail():
        # Last (partial / padded / duplicated) block: mask elements >= n so the
        # zero-padding (sigmoid(0)=0.5) and any garbage rows contribute nothing.
        row = jax.lax.broadcasted_iota(jnp.int32, (block_rows, _LANES), 0)
        col = jax.lax.broadcasted_iota(jnp.int32, (block_rows, _LANES), 1)
        valid = (base + row * _LANES + col) < n_ref[0]
        _accum(jnp.where(valid, p, 0.0), jnp.where(valid, t, 0.0))

    @pl.when(jnp.logical_not(needs_mask))
    def _interior():
        _accum(p, t)


@functools.partial(jax.jit, static_argnames=("smooth", "alpha", "beta", "gamma"))
def focal_tversky_loss(inputs, targets, smooth=1.0, alpha=0.5, beta=0.5, gamma=1.0):
    """Pallas TPU equivalent of FocalTverskyLoss.forward (logits in, scalar out)."""
    n = inputs.size  # static under jit; assumed < 2**31 (int32 index math)

    x = inputs.reshape(-1)
    t = targets.reshape(-1)

    # Keep native dtypes (bf16/int8 targets flow through; kernel upcasts in
    # VMEM).  Pad only so that `rows` is a multiple of the packed sublane tile
    # (f32 -> 8, bf16 -> 16, int8 -> 32), so BlockSpecs never over-read in the
    # sublane dim.  Typical image tensors need no pad at all.
    row_mult = max(_SUBLANES, 32 // x.dtype.itemsize, 32 // t.dtype.itemsize)
    padded = _round_up(max(n, 1), _LANES * row_mult)
    if padded != n:
        x = jnp.pad(x, (0, padded - n))
        t = jnp.pad(t, (0, padded - n))

    rows = padded // _LANES                       # multiple of row_mult
    block_rows = min(_MAX_BLOCK_ROWS, rows)       # multiple of row_mult
    num_blocks = pl.cdiv(rows, block_rows)

    # Split the row range across TensorCores when there is enough work; on
    # single-core chips the "parallel" axis of size 2 just runs sequentially.
    n_splits = 2 if num_blocks >= 2 else 1
    num_inner = pl.cdiv(num_blocks, n_splits)
    last_blk = num_blocks - 1

    def in_map(c, i, n_s):
        # Clamp so an odd-num_blocks overhang never indexes past the array; the
        # duplicated block is fully masked out in-kernel via the n check.
        return (jnp.minimum(c * num_inner + i, last_blk), 0)

    x2 = x.reshape(rows, _LANES)
    t2 = t.reshape(rows, _LANES)
    n_arr = jnp.array([n], dtype=jnp.int32)

    partials = pl.pallas_call(
        _focal_tversky_kernel,
        out_shape=jax.ShapeDtypeStruct((n_splits, 3, _SUBLANES, _LANES), jnp.float32),
        grid_spec=pltpu.PrefetchScalarGridSpec(
            num_scalar_prefetch=1,
            grid=(n_splits, num_inner),
            in_specs=[
                pl.BlockSpec((block_rows, _LANES), in_map),
                pl.BlockSpec((block_rows, _LANES), in_map),
            ],
            out_specs=pl.BlockSpec(
                (1, 3, _SUBLANES, _LANES), lambda c, i, n_s: (c, 0, 0, 0)
            ),
        ),
        compiler_params=pltpu.CompilerParams(
            dimension_semantics=("parallel", "arbitrary"),
        ),
    )(n_arr, x2, t2)

    # Tiny epilogue: cross-lane reduce of <= 2*3*8*128 floats + scalar combine
    # (fused by XLA into one small kernel).
    sums = partials.sum(axis=(0, 2, 3))
    tp, sum_p, sum_t = sums[0], sums[1], sums[2]
    fp = sum_p - tp          # sum((1 - t) * p)
    fn = sum_t - tp          # sum(t * (1 - p))

    tversky = (tp + smooth) / (tp + alpha * fp + beta * fn + smooth)
    return (1.0 - tversky) ** gamma


def _reference(inputs, targets, smooth=1.0, alpha=0.5, beta=0.5, gamma=1.0):
    p = jax.nn.sigmoid(inputs.astype(jnp.float32)).reshape(-1)
    t = targets.astype(jnp.float32).reshape(-1)
    tp = jnp.sum(p * t)
    fp = jnp.sum((1.0 - t) * p)
    fn = jnp.sum(t * (1.0 - p))
    tversky = (tp + smooth) / (tp + alpha * fp + beta * fn + smooth)
    return (1.0 - tversky) ** gamma


if __name__ == "__main__":
    key = jax.random.PRNGKey(0)
    k1, k2, k3, k4, k5, k6 = jax.random.split(key, 6)

    # Primary check: small NCHW logits + binary targets.
    B, C, H, W = 2, 4, 16, 16
    logits = jax.random.normal(k1, (B, C, H, W), dtype=jnp.float32)
    targets = (jax.random.uniform(k2, (B, C, H, W)) > 0.5).astype(jnp.float32)
    loss = jax.block_until_ready(focal_tversky_loss(logits, targets))
    ref = _reference(logits, targets)
    assert jnp.allclose(loss, ref, rtol=1e-4, atol=1e-4), (loss, ref)

    # Ragged shape: exercises the lane/sublane pad + in-kernel tail mask.
    logits2 = jax.random.normal(k3, (2, 3, 17, 19), dtype=jnp.float32)
    targets2 = (jax.random.uniform(k4, (2, 3, 17, 19)) > 0.5).astype(jnp.float32)
    loss2 = jax.block_until_ready(focal_tversky_loss(logits2, targets2))
    ref2 = _reference(logits2, targets2)
    assert jnp.allclose(loss2, ref2, rtol=1e-4, atol=1e-4), (loss2, ref2)

    # Multi-block shape: exercises the 2-way core split, the odd-block clamp
    # and the partial last grid block.
    logits3 = jax.random.normal(k5, (3, 4, 304, 304), dtype=jnp.float32)
    targets3 = (jax.random.uniform(k6, (3, 4, 304, 304)) > 0.5).astype(jnp.float32)
    loss3 = jax.block_until_ready(focal_tversky_loss(logits3, targets3))
    ref3 = _reference(logits3, targets3)
    assert jnp.allclose(loss3, ref3, rtol=1e-4, atol=1e-4), (loss3, ref3)

    print("KERNEL_OK")
</pallas_src>

<mosaic_0001>
module attributes {stable_mosaic.version = 11 : i64} {
  func.func @_focal_tversky_kernel(%arg0: i32, %arg1: i32, %arg2: memref<1xi32, #tpu.memory_space<smem>>, %arg3: memref<16x128xf32, #tpu.memory_space<vmem>>, %arg4: memref<16x128xf32, #tpu.memory_space<vmem>>, %arg5: memref<1x3x8x128xf32, #tpu.memory_space<vmem>>) attributes {dimension_semantics = [#tpu.dimension_semantics<parallel>, #tpu.dimension_semantics<arbitrary>], iteration_bounds = array<i64: 1, 1>, scalar_prefetch = 1 : i64, scratch_operands = 0 : i64, tpu.core_type = #tpu.core_type<tc>, window_params = [{transform_indices = @transform_0, window_bounds = array<i64: 16, 128>}, {transform_indices = @transform_1, window_bounds = array<i64: 16, 128>}, {transform_indices = @transform_2, window_bounds = array<i64: 1, 3, 8, 128>}]} {
    %c0_i32 = arith.constant 0 : i32
    %0 = arith.cmpi eq, %arg1, %c0_i32 : i32
    %1 = arith.extui %0 : i1 to i32
    %c0_i32_0 = arith.constant 0 : i32
    %2 = arith.cmpi ne, %1, %c0_i32_0 : i32
    scf.if %2 {
      %cst_10 = arith.constant 0.000000e+00 : f32
      %23 = vector.broadcast %cst_10 : f32 to vector<1x3x8x128xf32>
      %c0_11 = arith.constant 0 : index
      %c0_12 = arith.constant 0 : index
      %c0_13 = arith.constant 0 : index
      %c0_14 = arith.constant 0 : index
      %24 = vector.load %arg5[%c0_11, %c0_12, %c0_13, %c0_14] : memref<1x3x8x128xf32, #tpu.memory_space<vmem>>, vector<1x3x8x128xf32>
      tpu.vector_store %arg5[%c0_11, %c0_12, %c0_13, %c0_14], %23 {strides = array<i32>} : memref<1x3x8x128xf32, #tpu.memory_space<vmem>>, vector<1x3x8x128xf32>,
    } else {
    }
    %c0 = arith.constant 0 : index
    %c0_1 = arith.constant 0 : index
    %3 = vector.load %arg3[%c0, %c0_1] : memref<16x128xf32, #tpu.memory_space<vmem>>, vector<16x128xf32>
    %c0_2 = arith.constant 0 : index
    %c0_3 = arith.constant 0 : index
    %4 = vector.load %arg4[%c0_2, %c0_3] : memref<16x128xf32, #tpu.memory_space<vmem>>, vector<16x128xf32>
    %cst = arith.constant 5.000000e-01 : f32
    %5 = vector.broadcast %cst : f32 to vector<16x128xf32>
    %6 = arith.mulf %5, %3 : vector<16x128xf32>
    %7 = math.tanh %6 : vector<16x128xf32>
    %cst_4 = arith.constant 5.000000e-01 : f32
    %8 = vector.broadcast %cst_4 : f32 to vector<16x128xf32>
    %9 = arith.mulf %8, %7 : vector<16x128xf32>
    %cst_5 = arith.constant 5.000000e-01 : f32
    %10 = vector.broadcast %cst_5 : f32 to vector<16x128xf32>
    %11 = arith.addf %9, %10 : vector<16x128xf32>
    %c1_i32 = arith.constant 1 : i32
    %12 = arith.muli %arg0, %c1_i32 : i32
    %13 = arith.addi %12, %arg1 : i32
    %c2048_i32 = arith.constant 2048 : i32
    %14 = arith.muli %13, %c2048_i32 : i32
    %c2048_i32_6 = arith.constant 2048 : i32
    %15 = arith.addi %14, %c2048_i32_6 : i32
    %c0_7 = arith.constant 0 : index
    %16 = memref.load %arg2[%c0_7] : memref<1xi32, #tpu.memory_space<smem>>
    %17 = arith.cmpi sgt, %15, %16 : i32
    %18 = arith.extui %17 : i1 to i32
    %c0_i32_8 = arith.constant 0 : i32
    %19 = arith.cmpi ne, %18, %c0_i32_8 : i32
    scf.if %19 {
      %23 = tpu.iota {dimensions = array<i32: 0>} : vector<16x128xi32>
      %24 = tpu.iota {dimensions = array<i32: 1>} : vector<16x128xi32>
      %c128_i32 = arith.constant 128 : i32
      %25 = vector.broadcast %c128_i32 : i32 to vector<16x128xi32>
      %26 = arith.muli %23, %25 : vector<16x128xi32>
      %27 = vector.broadcast %14 : i32 to vector<16x128xi32>
      %28 = arith.addi %27, %26 : vector<16x128xi32>
      %29 = arith.addi %28, %24 : vector<16x128xi32>
      %c0_10 = arith.constant 0 : index
      %30 = memref.load %arg2[%c0_10] : memref<1xi32, #tpu.memory_space<smem>>
      %31 = vector.broadcast %30 : i32 to vector<16x128xi32>
      %32 = arith.cmpi slt, %29, %31 : vector<16x128xi32>
      %cst_11 = arith.constant 0.000000e+00 : f32
      %33 = vector.broadcast %cst_11 : f32 to vector<16x128xf32>
      %34 = arith.select %32, %11, %33 : vector<16x128xi1>, vector<16x128xf32>
      %cst_12 = arith.constant 0.000000e+00 : f32
      %35 = vector.broadcast %cst_12 : f32 to vector<16x128xf32>
      %36 = arith.select %32, %4, %35 : vector<16x128xi1>, vector<16x128xf32>
      %c0_13 = arith.constant 0 : index
      %c0_14 = arith.constant 0 : index
      %c0_15 = arith.constant 0 : index
      %c0_16 = arith.constant 0 : index
      %37 = vector.load %arg5[%c0_13, %c0_14, %c0_15, %c0_16] : memref<1x3x8x128xf32, #tpu.memory_space<vmem>>, vector<1x1x8x128xf32>
      %38 = vector.shape_cast %37 : vector<1x1x8x128xf32> to vector<8x128xf32>
      %39 = arith.mulf %34, %36 : vector<16x128xf32>
      %40 = vector.shape_cast %39 : vector<16x128xf32> to vector<2x8x128xf32>
      %cst_17 = arith.constant dense<0.000000e+00> : vector<8x128xf32>
      %41 = vector.multi_reduction <add>, %40, %cst_17 [0] : vector<2x8x128xf32> to vector<8x128xf32>
      %42 = arith.addf %38, %41 : vector<8x128xf32>
      %c0_18 = arith.constant 0 : index
      %c0_19 = arith.constant 0 : index
      %c0_20 = arith.constant 0 : index
      %c0_21 = arith.constant 0 : index
      %43 = vector.load %arg5[%c0_18, %c0_19, %c0_20, %c0_21] : memref<1x3x8x128xf32, #tpu.memory_space<vmem>>, vector<1x1x8x128xf32>
      %44 = vector.shape_cast %43 : vector<1x1x8x128xf32> to vector<8x128xf32>
      %45 = vector.shape_cast %42 : vector<8x128xf32> to vector<1x1x8x128xf32>
      tpu.vector_store %arg5[%c0_18, %c0_19, %c0_20, %c0_21], %45 {strides = array<i32>} : memref<1x3x8x128xf32, #tpu.memory_space<vmem>>, vector<1x1x8x128xf32>,
      %c0_22 = arith.constant 0 : index
      %c1 = arith.constant 1 : index
      %c0_23 = arith.constant 0 : index
      %c0_24 = arith.constant 0 : index
      %46 = vector.load %arg5[%c0_22, %c1, %c0_23, %c0_24] : memref<1x3x8x128xf32, #tpu.memory_space<vmem>>, vector<1x1x8x128xf32>
      %47 = vector.shape_cast %46 : vector<1x1x8x128xf32> to vector<8x128xf32>
      %48 = vector.shape_cast %34 : vector<16x128xf32> to vector<2x8x128xf32>
      %cst_25 = arith.constant dense<0.000000e+00> : vector<8x128xf32>
      %49 = vector.multi_reduction <add>, %48, %cst_25 [0] : vector<2x8x128xf32> to vector<8x128xf32>
      %50 = arith.addf %47, %49 : vector<8x128xf32>
      %c0_26 = arith.constant 0 : index
      %c1_27 = arith.constant 1 : index
      %c0_28 = arith.constant 0 : index
      %c0_29 = arith.constant 0 : index
      %51 = vector.load %arg5[%c0_26, %c1_27, %c0_28, %c0_29] : memref<1x3x8x128xf32, #tpu.memory_space<vmem>>, vector<1x1x8x128xf32>
      %52 = vector.shape_cast %51 : vector<1x1x8x128xf32> to vector<8x128xf32>
      %53 = vector.shape_cast %50 : vector<8x128xf32> to vector<1x1x8x128xf32>
      tpu.vector_store %arg5[%c0_26, %c1_27, %c0_28, %c0_29], %53 {strides = array<i32>} : memref<1x3x8x128xf32, #tpu.memory_space<vmem>>, vector<1x1x8x128xf32>,
      %c0_30 = arith.constant 0 : index
      %c2 = arith.constant 2 : index
      %c0_31 = arith.constant 0 : index
      %c0_32 = arith.constant 0 : index
      %54 = vector.load %arg5[%c0_30, %c2, %c0_31, %c0_32] : memref<1x3x8x128xf32, #tpu.memory_space<vmem>>, vector<1x1x8x128xf32>
      %55 = vector.shape_cast %54 : vector<1x1x8x128xf32> to vector<8x128xf32>
      %56 = vector.shape_cast %36 : vector<16x128xf32> to vector<2x8x128xf32>
      %cst_33 = arith.constant dense<0.000000e+00> : vector<8x128xf32>
      %57 = vector.multi_reduction <add>, %56, %cst_33 [0] : vector<2x8x128xf32> to vector<8x128xf32>
      %58 = arith.addf %55, %57 : vector<8x128xf32>
      %c0_34 = arith.constant 0 : index
      %c2_35 = arith.constant 2 : index
      %c0_36 = arith.constant 0 : index
      %c0_37 = arith.constant 0 : index
      %59 = vector.load %arg5[%c0_34, %c2_35, %c0_36, %c0_37] : memref<1x3x8x128xf32, #tpu.memory_space<vmem>>, vector<1x1x8x128xf32>
      %60 = vector.shape_cast %59 : vector<1x1x8x128xf32> to vector<8x128xf32>
      %61 = vector.shape_cast %58 : vector<8x128xf32> to vector<1x1x8x128xf32>
      tpu.vector_store %arg5[%c0_34, %c2_35, %c0_36, %c0_37], %61 {strides = array<i32>} : memref<1x3x8x128xf32, #tpu.memory_space<vmem>>, vector<1x1x8x128xf32>,
    } else {
    }
    %true = arith.constant true
    %20 = arith.xori %17, %true : i1
    %21 = arith.extui %20 : i1 to i32
    %c0_i32_9 = arith.constant 0 : i32
    %22 = arith.cmpi ne, %21, %c0_i32_9 : i32
    scf.if %22 {
      %c0_10 = arith.constant 0 : index
      %c0_11 = arith.constant 0 : index
      %c0_12 = arith.constant 0 : index
      %c0_13 = arith.constant 0 : index
      %23 = vector.load %arg5[%c0_10, %c0_11, %c0_12, %c0_13] : memref<1x3x8x128xf32, #tpu.memory_space<vmem>>, vector<1x1x8x128xf32>
      %24 = vector.shape_cast %23 : vector<1x1x8x128xf32> to vector<8x128xf32>
      %25 = arith.mulf %11, %4 : vector<16x128xf32>
      %26 = vector.shape_cast %25 : vector<16x128xf32> to vector<2x8x128xf32>
      %cst_14 = arith.constant dense<0.000000e+00> : vector<8x128xf32>
      %27 = vector.multi_reduction <add>, %26, %cst_14 [0] : vector<2x8x128xf32> to vector<8x128xf32>
      %28 = arith.addf %24, %27 : vector<8x128xf32>
      %c0_15 = arith.constant 0 : index
      %c0_16 = arith.constant 0 : index
      %c0_17 = arith.constant 0 : index
      %c0_18 = arith.constant 0 : index
      %29 = vector.load %arg5[%c0_15, %c0_16, %c0_17, %c0_18] : memref<1x3x8x128xf32, #tpu.memory_space<vmem>>, vector<1x1x8x128xf32>
      %30 = vector.shape_cast %29 : vector<1x1x8x128xf32> to vector<8x128xf32>
      %31 = vector.shape_cast %28 : vector<8x128xf32> to vector<1x1x8x128xf32>
      tpu.vector_store %arg5[%c0_15, %c0_16, %c0_17, %c0_18], %31 {strides = array<i32>} : memref<1x3x8x128xf32, #tpu.memory_space<vmem>>, vector<1x1x8x128xf32>,
      %c0_19 = arith.constant 0 : index
      %c1 = arith.constant 1 : index
      %c0_20 = arith.constant 0 : index
      %c0_21 = arith.constant 0 : index
      %32 = vector.load %arg5[%c0_19, %c1, %c0_20, %c0_21] : memref<1x3x8x128xf32, #tpu.memory_space<vmem>>, vector<1x1x8x128xf32>
      %33 = vector.shape_cast %32 : vector<1x1x8x128xf32> to vector<8x128xf32>
      %34 = vector.shape_cast %11 : vector<16x128xf32> to vector<2x8x128xf32>
      %cst_22 = arith.constant dense<0.000000e+00> : vector<8x128xf32>
      %35 = vector.multi_reduction <add>, %34, %cst_22 [0] : vector<2x8x128xf32> to vector<8x128xf32>
      %36 = arith.addf %33, %35 : vector<8x128xf32>
      %c0_23 = arith.constant 0 : index
      %c1_24 = arith.constant 1 : index
      %c0_25 = arith.constant 0 : index
      %c0_26 = arith.constant 0 : index
      %37 = vector.load %arg5[%c0_23, %c1_24, %c0_25, %c0_26] : memref<1x3x8x128xf32, #tpu.memory_space<vmem>>, vector<1x1x8x128xf32>
      %38 = vector.shape_cast %37 : vector<1x1x8x128xf32> to vector<8x128xf32>
      %39 = vector.shape_cast %36 : vector<8x128xf32> to vector<1x1x8x128xf32>
      tpu.vector_store %arg5[%c0_23, %c1_24, %c0_25, %c0_26], %39 {strides = array<i32>} : memref<1x3x8x128xf32, #tpu.memory_space<vmem>>, vector<1x1x8x128xf32>,
      %c0_27 = arith.constant 0 : index
      %c2 = arith.constant 2 : index
      %c0_28 = arith.constant 0 : index
      %c0_29 = arith.constant 0 : index
      %40 = vector.load %arg5[%c0_27, %c2, %c0_28, %c0_29] : memref<1x3x8x128xf32, #tpu.memory_space<vmem>>, vector<1x1x8x128xf32>
      %41 = vector.shape_cast %40 : vector<1x1x8x128xf32> to vector<8x128xf32>
      %42 = vector.shape_cast %4 : vector<16x128xf32> to vector<2x8x128xf32>
      %cst_30 = arith.constant dense<0.000000e+00> : vector<8x128xf32>
      %43 = vector.multi_reduction <add>, %42, %cst_30 [0] : vector<2x8x128xf32> to vector<8x128xf32>
      %44 = arith.addf %41, %43 : vector<8x128xf32>
      %c0_31 = arith.constant 0 : index
      %c2_32 = arith.constant 2 : index
      %c0_33 = arith.constant 0 : index
      %c0_34 = arith.constant 0 : index
      %45 = vector.load %arg5[%c0_31, %c2_32, %c0_33, %c0_34] : memref<1x3x8x128xf32, #tpu.memory_space<vmem>>, vector<1x1x8x128xf32>
      %46 = vector.shape_cast %45 : vector<1x1x8x128xf32> to vector<8x128xf32>
      %47 = vector.shape_cast %44 : vector<8x128xf32> to vector<1x1x8x128xf32>
      tpu.vector_store %arg5[%c0_31, %c2_32, %c0_33, %c0_34], %47 {strides = array<i32>} : memref<1x3x8x128xf32, #tpu.memory_space<vmem>>, vector<1x1x8x128xf32>,
    } else {
    }
    return
  }
  func.func @transform_0(%arg0: i32, %arg1: i32, %arg2: memref<1xi32, #tpu.memory_space<smem>>) -> (i32, i32) {
    %c1_i32 = arith.constant 1 : i32
    %0 = arith.muli %arg0, %c1_i32 : i32
    %1 = arith.addi %0, %arg1 : i32
    %c0_i32 = arith.constant 0 : i32
    %2 = arith.minsi %1, %c0_i32 : i32
    %c0_i32_0 = arith.constant 0 : i32
    %c0_i32_1 = arith.constant 0 : i32
    return %2, %c0_i32_0 : i32, i32
  }
  func.func @transform_1(%arg0: i32, %arg1: i32, %arg2: memref<1xi32, #tpu.memory_space<smem>>) -> (i32, i32) {
    %c1_i32 = arith.constant 1 : i32
    %0 = arith.muli %arg0, %c1_i32 : i32
    %1 = arith.addi %0, %arg1 : i32
    %c0_i32 = arith.constant 0 : i32
    %2 = arith.minsi %1, %c0_i32 : i32
    %c0_i32_0 = arith.constant 0 : i32
    %c0_i32_1 = arith.constant 0 : i32
    return %2, %c0_i32_0 : i32, i32
  }
  func.func @transform_2(%arg0: i32, %arg1: i32, %arg2: memref<1xi32, #tpu.memory_space<smem>>) -> (i32, i32, i32, i32) {
    %c0_i32 = arith.constant 0 : i32
    %c0_i32_0 = arith.constant 0 : i32
    %c0_i32_1 = arith.constant 0 : i32
    %c0_i32_2 = arith.constant 0 : i32
    return %arg0, %c0_i32, %c0_i32_0, %c0_i32_1 : i32, i32, i32, i32
  }
}

</mosaic_0001>

<llo_original>
// kernel: focal_tversky_loss.1
$region0: #{focal_tversky_loss.1}
  #allocation0 [shape = 'u32[]', space=smem, size = 0x4, offset = 0x4, fixed_abs, tag = 'smem constant byte address 0x4 - core index']
  #allocation1 [shape = 'u32[144,128]{1,0:T(1,128)}', space=vmem, size = 0x12000, scoped, tag = 'internal scratch']
  #allocation2 [shape = 's32[1]{0}', space=sflag, size = 0x4, scoped, tag = 'scoped memory for focal_tversky_loss.1']
  #allocation3 [shape = 's32[1]{0:T(128)S(6)}', space=smem, size = 0x200, scoped, tag = 'prefetched SMEM operand 0']
  %s0 = inlined_call_operand.<no memory space> [shape: s32[1], index: 0, kind: input, shape index: {}]
  %s1 = inlined_call_operand.vmem [shape: f32[16,128], index: 1, kind: input, shape index: {}]
  %s2 = inlined_call_operand.vmem [shape: f32[16,128], index: 2, kind: input, shape index: {}]
  %s3 = inlined_call_operand.vmem [shape: f32[1,3,8,128], index: 3, kind: output, shape index: {}]
  %s4 = sld [smem:[#allocation0]]
  $region30: #{focal_tversky_loss.1} parent=0
    _
  %s6 = ssub.s32 1, %s4
  %s7 = scalar_select 0, %s6, %s4
  %8 = sst [smem:[#allocation3]] %s0
  // Predicated region
  $region2: #{focal_tversky_loss.1} parent=0 // pred_check
    _
  $region3: #{focal_tversky_loss.1} parent=0 // pred_check_branch
    %10 = sbr.rel (0) target = $region5
  $region4: #{focal_tversky_loss.1} parent=0 // pred_region
    %s11 = sadd.s32 0, 0
    %p12 = scmp.lt.s32.totalorder %s11, 0
    %s13 = scalar_select %p12, %s11, 0
    %s14 = smul.u32 2, %s13
    %p15 = scmp.lt.s32.totalorder %s14, 1
    %s16 = scalar_select %p15, %s14, 1
    %s17 = smul.addr %s16, 8
    %s18 = scalar_lea.vmem %s1, %s17
    %s19 = sadd.s32 0, 0
    %p20 = scmp.lt.s32.totalorder %s19, 0
    %s21 = scalar_select %p20, %s19, 0
    %s22 = smul.u32 2, %s21
  $region5: #{focal_tversky_loss.1} parent=0 // pred_fallthru
    _
  // Predicated region
  $region6: #{focal_tversky_loss.1} parent=0 // pred_check
    _
  $region7: #{focal_tversky_loss.1} parent=0 // pred_check_branch
    %24 = sbr.rel (0) target = $region9
  $region8: #{focal_tversky_loss.1} parent=0 // pred_region
    %s25 = sadd.s32 0, 0
    %p26 = scmp.lt.s32.totalorder %s25, 0
    %s27 = scalar_select %p26, %s25, 0
    %s28 = smul.u32 2, %s27
    %p29 = scmp.lt.s32.totalorder %s28, 1
    %s30 = scalar_select %p29, %s28, 1
    %s31 = smul.addr %s30, 8
    %s32 = scalar_lea.vmem %s2, %s31
    %s33 = sadd.s32 0, 0
    %p34 = scmp.lt.s32.totalorder %s33, 0
    %s35 = scalar_select %p34, %s33, 0
    %s36 = smul.u32 2, %s35
  $region9: #{focal_tversky_loss.1} parent=0 // pred_fallthru
    _
  %s37 = sadd.s32 0, 0
  %p38 = scmp.lt.s32.totalorder %s37, 0
  %s39 = scalar_select %p38, %s37, 0
  %s40 = smul.u32 2, %s39
  %p41 = scmp.lt.s32.totalorder %s40, 1
  %s42 = scalar_select %p41, %s40, 1
  %s43 = smul.addr %s42, 8
  %s44 = scalar_lea.vmem %s1, %s43
  %s45 = sadd.s32 0, 0
  %p46 = scmp.lt.s32.totalorder %s45, 0
  %s47 = scalar_select %p46, %s45, 0
  %s48 = smul.u32 2, %s47
  %p49 = scmp.lt.s32.totalorder %s48, 1
  %s50 = scalar_select %p49, %s48, 1
  %s51 = smul.addr %s50, 8
  %s52 = scalar_lea.vmem %s2, %s51
  %s53 = sadd.s32 0, 0
  %p54 = scmp.lt.s32.totalorder %s53, 0
  %s55 = scalar_select %p54, %s53, 0
  %s56 = smul.u32 2, %s55
  %p57 = scmp.lt.s32.totalorder %s56, 1
  %s58 = scalar_select %p57, %s56, 1
  %s59 = smul.addr %s58, 8
  %s60 = scalar_lea.vmem %s1, %s59
  %s61 = sadd.s32 0, 0
  %p62 = scmp.lt.s32.totalorder %s61, 0
  %s63 = scalar_select %p62, %s61, 0
  %s64 = smul.u32 2, %s63
  %s65 = sadd.s32 0, 0
  %p66 = scmp.lt.s32.totalorder %s65, 0
  %s67 = scalar_select %p66, %s65, 0
  %s68 = smul.u32 2, %s67
  %p69 = scmp.lt.s32.totalorder %s68, 1
  %s70 = scalar_select %p69, %s68, 1
  %s71 = smul.addr %s70, 8
  %s72 = scalar_lea.vmem %s2, %s71
  %s73 = sadd.s32 0, 0
  %p74 = scmp.lt.s32.totalorder %s73, 0
  %s75 = scalar_select %p74, %s73, 0
  %s76 = smul.u32 2, %s75
  %p77 = scmp.eq.s32.totalorder 0, 0
  // Predicated region
  $region10: #{focal_tversky_loss.1} parent=0 // pred_check
    %p78 = pneg %p77
  $region11: #{focal_tversky_loss.1} parent=0 // pred_check_branch
    %80 = sbr.rel (%p78) target = $region13
  $region12: #{focal_tversky_loss.1} parent=0 // pred_region
    %81 = vst [vmem:[%s3] sm:$0xff] 0.0
    %82 = vst [vmem:[%s3 + $0x8] sm:$0xff] 0.0
    %83 = vst [vmem:[%s3 + $0x10] sm:$0xff] 0.0
  $region13: #{focal_tversky_loss.1} parent=0 // pred_fallthru
    _
  %v84 = vld [vmem:[%s60] sm:$0xff]
  %v85 = vld [vmem:[%s60 + $0x8] sm:$0xff]
  %v86 = vld [vmem:[%s72] sm:$0xff]
  %v87 = vld [vmem:[%s72 + $0x8] sm:$0xff]
  %v88 = vmul.f32 %v84, 0.5
  %v89 = vmul.f32 %v85, 0.5
  %v90 = vtanh.pop %v88
  %v91 = vtanh.pop %v89
  %v92 = vmul.f32 %v90, 0.5
  %v93 = vmul.f32 %v91, 0.5
  %v94 = vadd.f32 %v92, 0.5
  %v95 = vadd.f32 %v93, 0.5
  %s96 = sadd.s32 0, 0
  %s97 = smul.u32 %s96, 2048
  %s98 = sadd.s32 %s97, 2048
  %s99 = sld [smem:[#allocation3]]
  %p100 = scmp.gt.s32.totalorder %s98, %s99
  // Predicated region
  $region14: #{focal_tversky_loss.1} parent=0 // pred_check
    %p101 = pneg %p100
  $region15: #{focal_tversky_loss.1} parent=0 // pred_check_branch
    %103 = sbr.rel (%p101) target = $region17
  $region16: #{focal_tversky_loss.1} parent=0 // pred_region
    %v104 = vlaneseq
    %v105 = vshrl.u32 %v104, 7
    %v106 = vadd.s32 %v105, 8
    %v107 = vlaneseq
    %v108 = vand.u32 %v107, 127
    %v109 = vmul.u32 %v105, 128
    %v110 = vmul.u32 %v106, 128
    %v111 = vstv %s97
    %v112 = vadd.s32 %v111, %v109
    %v113 = vadd.s32 %v111, %v110
    %v114 = vadd.s32 %v112, %v108
    %v115 = vadd.s32 %v113, %v108
    %s116 = sld [smem:[#allocation3]]
    %v117 = vstv %s116
    %vm118 = vcmp.lt.s32.totalorder %v114, %v117
    %vm119 = vcmp.lt.s32.totalorder %v115, %v117
    %v120 = vsel %vm118, %v94, 0.0
    %v121 = vsel %vm119, %v95, 0.0
    %v122 = vsel %vm118, %v86, 0.0
    %v123 = vsel %vm119, %v87, 0.0
    %v124 = vld [vmem:[%s3] sm:$0xff]
    %v125 = vmul.f32 %v120, %v122
    %v126 = vmul.f32 %v121, %v123
    %v127 = vadd.f32 %v125, %v126
    %v128 = vadd.f32 %v124, %v127
    %129 = vst [vmem:[%s3] sm:$0xff] %v128
    %s130 = scalar_lea.vmem %s3, 8
    %v131 = vld [vmem:[%s130] sm:$0xff]
    %v132 = vadd.f32 %v120, %v121
    %v133 = vadd.f32 %v131, %v132
    %134 = vst [vmem:[%s130] sm:$0xff] %v133
    %s135 = scalar_lea.vmem %s3, 16
    %v136 = vld [vmem:[%s135] sm:$0xff]
    %v137 = vadd.f32 %v122, %v123
    %v138 = vadd.f32 %v136, %v137
    %139 = vst [vmem:[%s135] sm:$0xff] %v138
  $region17: #{focal_tversky_loss.1} parent=0 // pred_fallthru
    _
  %p140 = scmp.le.s32.totalorder %s98, %s99
  // Predicated region
  $region18: #{focal_tversky_loss.1} parent=0 // pred_check
    %p141 = pneg %p140
  $region19: #{focal_tversky_loss.1} parent=0 // pred_check_branch
    %143 = sbr.rel (%p141) target = $region21
  $region20: #{focal_tversky_loss.1} parent=0 // pred_region
    %v144 = vld [vmem:[%s3] sm:$0xff]
    %v145 = vmul.f32 %v94, %v86
    %v146 = vmul.f32 %v95, %v87
    %v147 = vadd.f32 %v145, %v146
    %v148 = vadd.f32 %v144, %v147
    %149 = vst [vmem:[%s3] sm:$0xff] %v148
    %s150 = scalar_lea.vmem %s3, 8
    %v151 = vld [vmem:[%s150] sm:$0xff]
    %v152 = vadd.f32 %v94, %v95
    %v153 = vadd.f32 %v151, %v152
    %154 = vst [vmem:[%s150] sm:$0xff] %v153
    %s155 = scalar_lea.vmem %s3, 16
    %v156 = vld [vmem:[%s155] sm:$0xff]
    %v157 = vadd.f32 %v86, %v87
    %v158 = vadd.f32 %v156, %v157
    %159 = vst [vmem:[%s155] sm:$0xff] %v158
  $region21: #{focal_tversky_loss.1} parent=0 // pred_fallthru
    _
  // Predicated region
  $region22: #{focal_tversky_loss.1} parent=0 // pred_check
    _
  $region23: #{focal_tversky_loss.1} parent=0 // pred_check_branch
    %161 = sbr.rel (0) target = $region25
  $region24: #{focal_tversky_loss.1} parent=0 // pred_region
    _
  $region25: #{focal_tversky_loss.1} parent=0 // pred_fallthru
    _
  // Predicated region
  $region26: #{focal_tversky_loss.1} parent=0 // pred_check
    _
  $region27: #{focal_tversky_loss.1} parent=0 // pred_check_branch
    %163 = sbr.rel (0) target = $region29
  $region28: #{focal_tversky_loss.1} parent=0 // pred_region
    _
  $region29: #{focal_tversky_loss.1} parent=0 // pred_fallthru
    _

</llo_original>
